<compile_context>
chip_gen: v7x
topology: tpu7x:2x2x1
jax: 0.10.0
libtpu: 0.0.40
codegen_flags: <defaults>
</compile_context>

<pallas_src>
import jax
import jax.numpy as jnp
from jax.experimental import pallas as pl
from jax.experimental.pallas import tpu as pltpu


# ---------------------------------------------------------------------------
# Kernel 1: hidden = X @ W   (contraction over the vocab axis, K-tiled)
# ---------------------------------------------------------------------------
def _embed_kernel(x_ref, w_ref, h_ref, acc_ref):
    # x_ref: [tm, tk]   w_ref: [tk, E]   h_ref: [tm, E]   acc_ref: f32 [tm, E]
    @pl.when(pl.program_id(1) == 0)
    def _():
        acc_ref[...] = jnp.zeros_like(acc_ref)

    acc_ref[...] += jnp.dot(x_ref[...], w_ref[...],
                            preferred_element_type=jnp.float32)

    @pl.when(pl.program_id(1) == pl.num_programs(1) - 1)
    def _():
        h_ref[...] = acc_ref[...].astype(h_ref.dtype)


# ---------------------------------------------------------------------------
# Kernel 2: out = hidden @ WT   (vocab projection, lane-dense output tiles)
# ---------------------------------------------------------------------------
def _project_kernel(h_ref, wt_ref, o_ref):
    # h_ref: [tm, E]   wt_ref: [E, tn]   o_ref: [tm, tn]
    o_ref[...] = jnp.dot(h_ref[...], wt_ref[...],
                         preferred_element_type=jnp.float32).astype(o_ref.dtype)


# ---------------------------------------------------------------------------
# Tiling / padding helpers
# ---------------------------------------------------------------------------
def _round_up(x, m):
    return -(-x // m) * m


def _pick_tile(size, target, align):
    """Tile size (multiple of `align`) for `size`.

    Prefers an exact divisor <= target; otherwise picks a tile that keeps
    padding small when `size` is rounded up to a multiple of the tile.
    """
    if size <= target:
        return _round_up(size, align)
    t = target
    while t >= align:
        if size % t == 0:
            return t
        t -= align
    n_tiles = -(-size // target)
    return _round_up(-(-size // n_tiles), align)


def _pad_dim(a, axis, multiple):
    pad = _round_up(a.shape[axis], multiple) - a.shape[axis]
    if pad == 0:
        return a
    widths = [(0, 0)] * a.ndim
    widths[axis] = (0, pad)
    return jnp.pad(a, widths)


def _vmem_limit_bytes(tile_bytes):
    """Scoped-VMEM limit: tile footprint * 1.5 + headroom, capped for v7x."""
    limit = int(1.5 * tile_bytes) + (4 << 20)
    return int(min(56 << 20, max(16 << 20, limit)))


# ---------------------------------------------------------------------------
# Forward wrapper
# ---------------------------------------------------------------------------
def word2vec_forward(x, W, WT, *, tm=None, tk=None, tn=None, compute_dtype=None):
    """out = (x @ W) @ WT, matching the PyTorch module's forward."""
    B, V = x.shape
    Vw, E = W.shape
    assert V == Vw and WT.shape == (E, V)
    out_dtype = x.dtype

    if compute_dtype is not None:
        x, W, WT = (a.astype(compute_dtype) for a in (x, W, WT))
    cdt = x.dtype
    in_isz = jnp.dtype(cdt).itemsize
    out_isz = jnp.dtype(out_dtype).itemsize

    # Tile targets: tm=256 fills v6e/v7x MXU rows; tk/tn lane-aligned (128);
    # tn<=2048 keeps the projection step well above per-step overhead while
    # bounding VMEM on v7x.
    tm = tm if tm is not None else _pick_tile(B, 256, 8)
    tk = tk if tk is not None else _pick_tile(V, 1024, 128)
    tn = tn if tn is not None else _pick_tile(V, 2048, 128)

    # Zero-pad to the tile grid (correct for both the contraction and the
    # projection: padded rows/cols are zero and are sliced off at the end).
    xp = _pad_dim(_pad_dim(x, 0, tm), 1, tk)
    Wp = _pad_dim(W, 0, tk)
    WTp = _pad_dim(WT, 1, tn)
    Bp, Vk = xp.shape
    Vn = WTp.shape[1]

    # ---- kernel 1: hidden = X @ W  (grid: batch tiles x K tiles) -----------
    grid1 = (Bp // tm, Vk // tk)
    vmem1 = _vmem_limit_bytes(
        2 * (tm * tk + tk * E) * in_isz      # double-buffered X / W tiles
        + 2 * tm * E * in_isz                # hidden output block
        + tm * E * 4)                        # f32 accumulator scratch
    hidden = pl.pallas_call(
        _embed_kernel,
        out_shape=jax.ShapeDtypeStruct((Bp, E), cdt),
        grid_spec=pltpu.PrefetchScalarGridSpec(
            num_scalar_prefetch=0,
            grid=grid1,
            in_specs=[
                pl.BlockSpec((tm, tk), lambda i, k: (i, k)),   # X tile
                pl.BlockSpec((tk, E), lambda i, k: (k, 0)),    # W K-slice
            ],
            out_specs=pl.BlockSpec((tm, E), lambda i, k: (i, 0)),
            scratch_shapes=[pltpu.VMEM((tm, E), jnp.float32)],
        ),
        compiler_params=pltpu.CompilerParams(
            dimension_semantics=("parallel", "arbitrary"),
            vmem_limit_bytes=vmem1),
    )(xp, Wp)

    # ---- kernel 2: out = hidden @ WT  (grid: batch tiles x vocab tiles) ----
    grid2 = (Bp // tm, Vn // tn)
    vmem2 = _vmem_limit_bytes(
        2 * (tm * E * in_isz + E * tn * in_isz + tm * tn * out_isz))
    out = pl.pallas_call(
        _project_kernel,
        out_shape=jax.ShapeDtypeStruct((Bp, Vn), out_dtype),
        grid_spec=pltpu.PrefetchScalarGridSpec(
            num_scalar_prefetch=0,
            grid=grid2,
            in_specs=[
                # hidden block is constant along j -> DMA'd once per batch tile
                pl.BlockSpec((tm, E), lambda i, j: (i, 0)),
                pl.BlockSpec((E, tn), lambda i, j: (0, j)),    # WT vocab slice
            ],
            out_specs=pl.BlockSpec((tm, tn), lambda i, j: (i, j)),
        ),
        compiler_params=pltpu.CompilerParams(
            # No cross-step scratch -> both axes independent; lets v7x shard
            # the vocab axis across its two TensorCores even at batch-tile 1.
            dimension_semantics=("parallel", "parallel"),
            vmem_limit_bytes=vmem2),
    )(hidden, WTp)

    if Bp != B or Vn != V:
        out = out[:B, :V]
    return out


def word2vec_reference(x, W, WT):
    return (x @ W) @ WT


def _assert_close(out, ref, rel_tol):
    # Error measured relative to the output scale.  Tolerances are chosen to
    # be robust to whichever f32 MXU pass configuration DEFAULT matmul
    # precision maps to on the chip / XLA version at hand (with full f32
    # passes on both sides the observed error is ~1e-6).
    ref32 = ref.astype(jnp.float32)
    scale = float(jnp.maximum(jnp.max(jnp.abs(ref32)), 1.0))
    err = float(jnp.max(jnp.abs(out.astype(jnp.float32) - ref32)))
    assert err <= rel_tol * scale, f"max abs err {err} vs scale {scale}"


if __name__ == "__main__":
    # Shapes consistent with the original module's demo setup:
    #   voc_size=128, embedding_size=32, small batch of one-hot rows, float32.
    voc_size, embedding_size, batch = 128, 32, 16
    dtype = jnp.float32

    key = jax.random.PRNGKey(0)
    k_w, k_wt, k_x, k_w2, k_wt2, k_x2 = jax.random.split(key, 6)

    # W  = -2 * rand(V, E) + 1  -> uniform in (-1, 1]
    W = (-2.0 * jax.random.uniform(k_w, (voc_size, embedding_size)) + 1.0).astype(dtype)
    # WT = -1 * rand(E, V) + 1  -> uniform in (0, 1]
    WT = (-1.0 * jax.random.uniform(k_wt, (embedding_size, voc_size)) + 1.0).astype(dtype)
    # One-hot input rows, as in the original model.
    X = jax.nn.one_hot(
        jax.random.randint(k_x, (batch,), 0, voc_size), voc_size, dtype=dtype)

    out = jax.block_until_ready(word2vec_forward(X, W, WT))
    ref = word2vec_reference(X, W, WT)
    assert out.shape == (batch, voc_size) and out.dtype == dtype
    _assert_close(out, ref, 2e-2)

    # Multi-tile + padding path: non-divisible shapes, dense X, explicit small
    # tiles so every grid axis has extent > 1 and the K accumulation runs.
    B2, V2, E2 = 100, 520, 48
    W2 = (-2.0 * jax.random.uniform(k_w2, (V2, E2)) + 1.0).astype(dtype)
    WT2 = (-1.0 * jax.random.uniform(k_wt2, (E2, V2)) + 1.0).astype(dtype)
    X2 = jax.random.normal(k_x2, (B2, V2), dtype=dtype)

    out2 = jax.block_until_ready(
        word2vec_forward(X2, W2, WT2, tm=32, tk=256, tn=256))
    ref2 = word2vec_reference(X2, W2, WT2)
    assert out2.shape == (B2, V2) and out2.dtype == dtype
    _assert_close(out2, ref2, 2e-2)

    # Optional bf16-weight path (default tiles): halves weight HBM/VMEM
    # traffic on v6e/v7x; f32 accumulation keeps error at bf16 rounding level.
    out3 = jax.block_until_ready(
        word2vec_forward(X2, W2, WT2, compute_dtype=jnp.bfloat16))
    assert out3.shape == (B2, V2) and out3.dtype == dtype
    _assert_close(out3, ref2, 5e-2)

    print("KERNEL_OK")
</pallas_src>

<mosaic_0001>
module attributes {stable_mosaic.version = 11 : i64} {
  func.func @_embed_kernel(%arg0: i32, %arg1: i32, %arg2: memref<16x128xf32, #tpu.memory_space<vmem>>, %arg3: memref<128x32xf32, #tpu.memory_space<vmem>>, %arg4: memref<16x32xf32, #tpu.memory_space<vmem>>, %arg5: memref<16x32xf32, #tpu.memory_space<vmem>>) attributes {dimension_semantics = [#tpu.dimension_semantics<parallel>, #tpu.dimension_semantics<arbitrary>], iteration_bounds = array<i64: 1, 1>, scalar_prefetch = 0 : i64, scratch_operands = 1 : i64, tpu.core_type = #tpu.core_type<tc>, window_params = [{transform_indices = @transform_0, window_bounds = array<i64: 16, 128>}, {transform_indices = @transform_1, window_bounds = array<i64: 128, 32>}, {transform_indices = @transform_2, window_bounds = array<i64: 16, 32>}]} {
    %c0_i32 = arith.constant 0 : i32
    %0 = arith.cmpi eq, %arg1, %c0_i32 : i32
    %1 = arith.extui %0 : i1 to i32
    %c0_i32_0 = arith.constant 0 : i32
    %2 = arith.cmpi ne, %1, %c0_i32_0 : i32
    scf.if %2 {
      %cst_10 = arith.constant 0.000000e+00 : f32
      %12 = vector.broadcast %cst_10 : f32 to vector<16x32xf32>
      %c0_11 = arith.constant 0 : index
      %c0_12 = arith.constant 0 : index
      %13 = vector.load %arg5[%c0_11, %c0_12] : memref<16x32xf32, #tpu.memory_space<vmem>>, vector<16x32xf32>
      tpu.vector_store %arg5[%c0_11, %c0_12], %12 {strides = array<i32>} : memref<16x32xf32, #tpu.memory_space<vmem>>, vector<16x32xf32>,
    } else {
    }
    %c0 = arith.constant 0 : index
    %c0_1 = arith.constant 0 : index
    %3 = vector.load %arg5[%c0, %c0_1] : memref<16x32xf32, #tpu.memory_space<vmem>>, vector<16x32xf32>
    %c0_2 = arith.constant 0 : index
    %c0_3 = arith.constant 0 : index
    %4 = vector.load %arg2[%c0_2, %c0_3] : memref<16x128xf32, #tpu.memory_space<vmem>>, vector<16x128xf32>
    %c0_4 = arith.constant 0 : index
    %c0_5 = arith.constant 0 : index
    %5 = vector.load %arg3[%c0_4, %c0_5] : memref<128x32xf32, #tpu.memory_space<vmem>>, vector<128x32xf32>
    %cst = arith.constant dense<0.000000e+00> : vector<16x32xf32>
    %6 = tpu.matmul %4, %5, %cst {dimension_numbers = #tpu.dot_dimension_numbers<[1], [0], [0], [1], [0, 0, 1, 1], [], []>} : vector<16x128xf32>, vector<128x32xf32>, vector<16x32xf32> -> vector<16x32xf32>
    %7 = arith.addf %3, %6 : vector<16x32xf32>
    %c0_6 = arith.constant 0 : index
    %c0_7 = arith.constant 0 : index
    %8 = vector.load %arg5[%c0_6, %c0_7] : memref<16x32xf32, #tpu.memory_space<vmem>>, vector<16x32xf32>
    tpu.vector_store %arg5[%c0_6, %c0_7], %7 {strides = array<i32>} : memref<16x32xf32, #tpu.memory_space<vmem>>, vector<16x32xf32>,
    %c0_i32_8 = arith.constant 0 : i32
    %9 = arith.cmpi eq, %arg1, %c0_i32_8 : i32
    %10 = arith.extui %9 : i1 to i32
    %c0_i32_9 = arith.constant 0 : i32
    %11 = arith.cmpi ne, %10, %c0_i32_9 : i32
    scf.if %11 {
      %c0_10 = arith.constant 0 : index
      %c0_11 = arith.constant 0 : index
      %12 = vector.load %arg5[%c0_10, %c0_11] : memref<16x32xf32, #tpu.memory_space<vmem>>, vector<16x32xf32>
      %c0_12 = arith.constant 0 : index
      %c0_13 = arith.constant 0 : index
      %13 = vector.load %arg4[%c0_12, %c0_13] : memref<16x32xf32, #tpu.memory_space<vmem>>, vector<16x32xf32>
      tpu.vector_store %arg4[%c0_12, %c0_13], %12 {strides = array<i32>} : memref<16x32xf32, #tpu.memory_space<vmem>>, vector<16x32xf32>,
    } else {
    }
    return
  }
  func.func @transform_0(%arg0: i32, %arg1: i32) -> (i32, i32) {
    %c0_i32 = arith.constant 0 : i32
    return %arg0, %arg1 : i32, i32
  }
  func.func @transform_1(%arg0: i32, %arg1: i32) -> (i32, i32) {
    %c0_i32 = arith.constant 0 : i32
    %c0_i32_0 = arith.constant 0 : i32
    return %arg1, %c0_i32 : i32, i32
  }
  func.func @transform_2(%arg0: i32, %arg1: i32) -> (i32, i32) {
    %c0_i32 = arith.constant 0 : i32
    %c0_i32_0 = arith.constant 0 : i32
    return %arg0, %c0_i32 : i32, i32
  }
}

</mosaic_0001>

<llo_original>
// kernel: tpu_custom_call.1
$region0: #{tpu_custom_call.1}
  #allocation0 [shape = 'u32[]', space=smem, size = 0x4, offset = 0x4, fixed_abs, tag = 'smem constant byte address 0x4 - core index']
  #allocation1 [shape = 'u32[144,128]{1,0:T(1,128)}', space=vmem, size = 0x12000, scoped, tag = 'internal scratch']
  #allocation2 [shape = 'f32[16,32]{1,0:T(8,128)}', space=vmem, size = 0x2000, scoped, tag = 'scratch operand']
  %s0 = inlined_call_operand.vmem [shape: f32[16,128], index: 0, kind: input, shape index: {}]
  %s1 = inlined_call_operand.vmem [shape: f32[128,32], index: 1, kind: input, shape index: {}]
  %s2 = inlined_call_operand.hbm [shape: f32[16,32], index: 2, kind: output, shape index: {}]
  %s3 = sld [smem:[#allocation0]]
  $region26: #{tpu_custom_call.1} parent=0
    _
  %s5 = ssub.s32 1, %s3
  %s6 = scalar_select 0, %s5, %s3
  $region1: #{tpu_custom_call.1} parent=0
    #allocation3 [shape = 'u8[8192]{0}', space=vmem, size = 0x2000, scoped, tag = 'output window, operand 0, single buffered']
    #allocation4 [shape = 's32[1]{0}', space=sflag, size = 0x4, scoped, tag = 'scoped memory for tpu_custom_call.1']
    %7 = vsyncpa [#allocation4], 0
    // Predicated region
    $region2: #{tpu_custom_call.1} parent=1 // pred_check
      _
    $region3: #{tpu_custom_call.1} parent=1 // pred_check_branch
      %9 = sbr.rel (0) target = $region5
    $region4: #{tpu_custom_call.1} parent=1 // pred_region
      _
    $region5: #{tpu_custom_call.1} parent=1 // pred_fallthru
      _
    // Predicated region
    $region6: #{tpu_custom_call.1} parent=1 // pred_check
      _
    $region7: #{tpu_custom_call.1} parent=1 // pred_check_branch
      %11 = sbr.rel (0) target = $region9
    $region8: #{tpu_custom_call.1} parent=1 // pred_region
      _
    $region9: #{tpu_custom_call.1} parent=1 // pred_fallthru
      _
    %p12 = scmp.eq.s32.totalorder 0, 0
    // Predicated region
    $region10: #{tpu_custom_call.1} parent=1 // pred_check
      %p13 = pneg %p12
    $region11: #{tpu_custom_call.1} parent=1 // pred_check_branch
      %15 = sbr.rel (%p13) target = $region13
    $region12: #{tpu_custom_call.1} parent=1 // pred_region
      %vm16 = vcmask 261120
      %17 = vst.msk [vmem:[#allocation2] sm:$0xff] %vm16, 0.0
      %18 = vst.msk [vmem:[#allocation2 + $0x8] sm:$0xff] %vm16, 0.0
    $region13: #{tpu_custom_call.1} parent=1 // pred_fallthru
      _
    %v19 = vld [vmem:[#allocation2] sm:$0xff]
    %v20 = vld [vmem:[#allocation2 + $0x8] sm:$0xff]
    %v21 = vld [vmem:[%s0] sm:$0xff]
    %v22 = vld [vmem:[%s0 + $0x8] sm:$0xff]
    %v23 = vld [vmem:[%s1] sm:$0xff]
    %v24 = vld [vmem:[%s1 + $0x8] sm:$0xff]
    %v25 = vld [vmem:[%s1 + $0x10] sm:$0xff]
    %v26 = vld [vmem:[%s1 + $0x18] sm:$0xff]
    %v27 = vld [vmem:[%s1 + $0x20] sm:$0xff]
    %v28 = vld [vmem:[%s1 + $0x28] sm:$0xff]
    %v29 = vld [vmem:[%s1 + $0x30] sm:$0xff]
    %v30 = vld [vmem:[%s1 + $0x38] sm:$0xff]
    %v31 = vld [vmem:[%s1 + $0x40] sm:$0xff]
    %v32 = vld [vmem:[%s1 + $0x48] sm:$0xff]
    %v33 = vld [vmem:[%s1 + $0x50] sm:$0xff]
    %v34 = vld [vmem:[%s1 + $0x58] sm:$0xff]
    %v35 = vld [vmem:[%s1 + $0x60] sm:$0xff]
    %v36 = vld [vmem:[%s1 + $0x68] sm:$0xff]
    %v37 = vld [vmem:[%s1 + $0x70] sm:$0xff]
    %v38 = vld [vmem:[%s1 + $0x78] sm:$0xff]
    %39 = vmatprep.subr.mxu0 0.0
    %40 = vmatpush1.msra.mxu0 %v23
    %41 = vmatprep.subr.mxu0 0.0
    %42 = vmatpush1.msra.mxu0 %v24
    %43 = vmatprep.subr.mxu0 0.0
    %44 = vmatpush1.msra.mxu0 %v25
    %45 = vmatprep.subr.mxu0 0.0
    %46 = vmatpush1.msra.mxu0 %v26
    %47 = vmatprep.subr.mxu0 0.0
    %48 = vmatpush1.msra.mxu0 %v27
    %49 = vmatprep.subr.mxu0 0.0
    %50 = vmatpush1.msra.mxu0 %v28
    %51 = vmatprep.subr.mxu0 0.0
    %52 = vmatpush1.msra.mxu0 %v29
    %53 = vmatprep.subr.mxu0 0.0
    %54 = vmatpush1.msra.mxu0 %v30
    %55 = vmatprep.subr.mxu0 0.0
    %56 = vmatpush1.msra.mxu0 %v31
    %57 = vmatprep.subr.mxu0 0.0
    %58 = vmatpush1.msra.mxu0 %v32
    %59 = vmatprep.subr.mxu0 0.0
    %60 = vmatpush1.msra.mxu0 %v33
    %61 = vmatprep.subr.mxu0 0.0
    %62 = vmatpush1.msra.mxu0 %v34
    %63 = vmatprep.subr.mxu0 0.0
    %64 = vmatpush1.msra.mxu0 %v35
    %65 = vmatprep.subr.mxu0 0.0
    %66 = vmatpush1.msra.mxu0 %v36
    %67 = vmatprep.subr.mxu0 0.0
    %68 = vmatpush1.msra.mxu0 %v37
    %69 = vmatprep.subr.mxu0 0.0
    %70 = vmatpush1.msra.mxu0 %v38
    %71 = vmatprep.subr.mxu0 0.0
    %72 = vmatpush1.msra.mxu0 0.0
    %73 = vmatprep.subr.mxu0 0.0
    %74 = vmatpush1.msra.mxu0 0.0
    %75 = vmatprep.subr.mxu0 0.0
    %76 = vmatpush1.msra.mxu0 0.0
    %77 = vmatprep.subr.mxu0 0.0
    %78 = vmatpush1.msra.mxu0 0.0
    %79 = vmatprep.subr.mxu0 0.0
    %80 = vmatpush1.msra.mxu0 0.0
    %81 = vmatprep.subr.mxu0 0.0
    %82 = vmatpush1.msra.mxu0 0.0
    %83 = vmatprep.subr.mxu0 0.0
    %84 = vmatpush1.msra.mxu0 0.0
    %85 = vmatprep.subr.mxu0 0.0
    %86 = vmatpush1.msra.mxu0 0.0
    %87 = vmatprep.subr.mxu0 0.0
    %88 = vmatpush1.msra.mxu0 0.0
    %89 = vmatprep.subr.mxu0 0.0
    %90 = vmatpush1.msra.mxu0 0.0
    %91 = vmatprep.subr.mxu0 0.0
    %92 = vmatpush1.msra.mxu0 0.0
    %93 = vmatprep.subr.mxu0 0.0
    %94 = vmatpush1.msra.mxu0 0.0
    %95 = vmatprep.subr.mxu0 0.0
    %96 = vmatpush1.msra.mxu0 0.0
    %97 = vmatprep.subr.mxu0 0.0
    %98 = vmatpush1.msra.mxu0 0.0
    %99 = vmatprep.subr.mxu0 0.0
    %100 = vmatpush1.msra.mxu0 0.0
    %101 = vmatprep.subr.mxu0 0.0
    %102 = vmatpush1.msra.mxu0 0.0
    %103 = vmatprep.mubr.f32.mxu0 0.0
    %104 = vmatmul.mubr.f32.gmra.mrb[0].mxu0 %v21
    %v105 = vpop.f32.mrb[0].mxu0
    %v106 = vadd.f32 0.0, %v105
    %v107 = vpop.f32.mrb[0].mxu0
    %108 = vmatprep.mubr.f32.mxu0 0.0
    %109 = vmatmul.mubr.f32.gmra.mrb[0].mxu0 %v22
    %v110 = vpop.f32.mrb[0].mxu0
    %v111 = vadd.f32 0.0, %v110
    %v112 = vpop.f32.mrb[0].mxu0
    %113 = vdwg.mxu0
    %v114 = vadd.f32 %v19, %v106
    %v115 = vadd.f32 %v20, %v111
    %vm116 = vcmask 261120
    %117 = vst.msk [vmem:[#allocation2] sm:$0xff] %vm116, %v114
    %118 = vst.msk [vmem:[#allocation2 + $0x8] sm:$0xff] %vm116, %v115
    // Predicated region
    $region14: #{tpu_custom_call.1} parent=1 // pred_check
      %p119 = pneg %p12
    $region15: #{tpu_custom_call.1} parent=1 // pred_check_branch
      %121 = sbr.rel (%p119) target = $region17
    $region16: #{tpu_custom_call.1} parent=1 // pred_region
      %v122 = vld [vmem:[#allocation2] sm:$0xff]
      %v123 = vld [vmem:[#allocation2 + $0x8] sm:$0xff]
      %124 = vst.msk [vmem:[#allocation3] sm:$0xff] %vm116, %v122
      %125 = vst.msk [vmem:[#allocation3 + $0x8] sm:$0xff] %vm116, %v123
    $region17: #{tpu_custom_call.1} parent=1 // pred_fallthru
      _
    // Predicated region
    $region18: #{tpu_custom_call.1} parent=1 // pred_check
      _
    $region19: #{tpu_custom_call.1} parent=1 // pred_check_branch
      %127 = sbr.rel (0) target = $region21
    $region20: #{tpu_custom_call.1} parent=1 // pred_region
      %s129 = ssub.s32 256, 256
      %130 = vsyncadd [#allocation4], %s129
      %s131 = sshll.u32 [#allocation3], 4
      %s132 = int_to_ptr.vmem [resolvable:$true] %s131
      %137 = dma.vmem_to_hbm [thread:$0]  %s132, 256, %s2, [#allocation4], 128, 128, 8
    $region21: #{tpu_custom_call.1} parent=1 // pred_fallthru
      _
    // Predicated region
    $region22: #{tpu_custom_call.1} parent=1 // pred_check
      _
    $region23: #{tpu_custom_call.1} parent=1 // pred_check_branch
      %139 = sbr.rel (0) target = $region25
    $region24: #{tpu_custom_call.1} parent=1 // pred_region
      %140 = dma.done [#allocation4], 256
    $region25: #{tpu_custom_call.1} parent=1 // pred_fallthru
      _
    %141 = vsyncpa [#allocation4], 1

</llo_original>
